<compile_context>
chip_gen: v6e
topology: v6e:2x2x1
jax: 0.10.0
libtpu: 0.0.40
codegen_flags: <defaults>
</compile_context>

<pallas_src>
import functools

import jax
import jax.numpy as jnp
from jax.experimental import pallas as pl
from jax.experimental.pallas import tpu as pltpu


def _round_up(n, m):
    return ((n + m - 1) // m) * m


def _tpu_generation():
    """Best-effort TPU-generation sniffing from the device kind string."""
    try:
        kind = jax.devices()[0].device_kind.lower()
    except Exception:
        return "unknown"
    if "v5 lite" in kind or "v5lite" in kind or "v5e" in kind:
        return "v5e"
    if "v7" in kind:
        return "v7x"
    if "v6" in kind:
        return "v6e"
    return "other"


def _make_mlp_kernel(ew_dtype):
    """Fused 3-layer MLP kernel; batch on lanes.

    xt_ref : [D+1, bt] bf16  (last row of x^T is all-ones -> layer-1 bias folded)
    w1_ref : [H, D+1]  bf16  (bias appended as the extra input column)
    w2_ref : [H, H]    bf16
    b2_ref : [H, 1]    ew_dtype
    w3_ref : [H, 1]    ew_dtype
    o_ref  : [1, bt]   f32   (b3 is added in the wrapper)

    ew_dtype = bf16 on v6e/v7x (bf16 VPU), f32 on v5e (no bf16 VPU).
    """

    def kernel(xt_ref, w1_ref, w2_ref, b2_ref, w3_ref, o_ref):
        # Layer 1 (bias folded into the matmul): bf16 MXU, f32 accumulation.
        h1 = jnp.dot(w1_ref[...], xt_ref[...],
                     preferred_element_type=jnp.float32)          # [H, bt] f32
        h1 = h1.astype(ew_dtype)
        h1 = jnp.maximum(h1, 0.2 * h1)                            # LeakyReLU(0.2)

        # Layer 2: the FLOP-dominant matmul.
        h2 = jnp.dot(w2_ref[...], h1.astype(jnp.bfloat16),
                     preferred_element_type=jnp.float32)          # [H, bt] f32
        h2 = h2.astype(ew_dtype) + b2_ref[...]                    # lane-broadcast bias
        h2 = jnp.maximum(h2, 0.2 * h2)

        # Layer 3 (H -> 1): VPU multiply + sublane (XLU) reduction, f32 accumulate.
        prod = (h2 * w3_ref[...]).astype(jnp.float32)             # [H, bt]
        o_ref[...] = jnp.sum(prod, axis=0, keepdims=True)         # [1, bt] f32

    return kernel


def discriminator_forward(x, params, *, batch_tile=8192):
    """Runs the 3-layer MLP discriminator as one Pallas kernel.

    x: [B, input_dim] float32
    params (PyTorch nn.Linear layout, y = W @ x_col + b):
        w1 [H, D], b1 [H, 1], w2 [H, H], b2 [H, 1], w3 [H, 1], b3 [1, 1]
    returns: [B, 1] float32
    """
    x = x.astype(jnp.float32)
    B, D = x.shape
    H = params["w1"].shape[0]

    gen = _tpu_generation()
    if gen == "v5e":
        ew_dtype = jnp.float32      # v5e VPU/EUP has no bf16 -> keep elementwise f32
        tile_cap = 4096             # 16 MiB scoped-VMEM default on v5e
    else:
        ew_dtype = jnp.bfloat16     # v6e/v7x: bf16 VPU, halves elementwise passes
        tile_cap = 8192             # fits the 32 MiB scoped default (v7x: 64 MiB phys)

    # ---- Batch-tile selection -------------------------------------------------
    bt_req = _round_up(min(batch_tile, tile_cap), 128)
    b128 = _round_up(B, 128)
    bt = max(128, min(bt_req, b128))
    if gen == "v7x" and b128 > 128:
        # v7x has 2 TensorCores: ensure >= 2 tiles so the "parallel" axis spans both.
        bt = min(bt, _round_up((b128 + 1) // 2, 128))
    Bp = _round_up(B, bt)
    n_tiles = Bp // bt

    # ---- Host-side input/weight prep (fused pad + ones-augment + cast + T) -----
    x_aug = jnp.concatenate([x, jnp.ones((B, 1), jnp.float32)], axis=1)   # [B, D+1]
    if Bp != B:
        x_aug = jnp.pad(x_aug, ((0, Bp - B), (0, 0)))
    x_t = x_aug.astype(jnp.bfloat16).T                                    # [D+1, Bp]

    w1 = jnp.concatenate([params["w1"], params["b1"].reshape(H, 1)],
                         axis=1).astype(jnp.bfloat16)                     # [H, D+1]
    w2 = params["w2"].astype(jnp.bfloat16)                                # [H, H]
    b2 = params["b2"].reshape(H, 1).astype(ew_dtype)                      # [H, 1]
    w3 = params["w3"].reshape(H, 1).astype(ew_dtype)                      # [H, 1]
    b3 = params["b3"].reshape(()).astype(jnp.float32)                     # scalar

    Daug = D + 1
    flops = 2 * Bp * (Daug * H + H * H + H)
    bytes_accessed = int(x_t.size * 2 + Bp * 4 + w1.size * 2 + w2.size * 2
                         + (b2.size + w3.size) * jnp.dtype(ew_dtype).itemsize)

    def full(a):
        zeros = (0,) * a.ndim
        return pl.BlockSpec(a.shape, lambda i: zeros)

    out_row = pl.pallas_call(
        _make_mlp_kernel(ew_dtype),
        out_shape=jax.ShapeDtypeStruct((1, Bp), jnp.float32),
        grid_spec=pltpu.PrefetchScalarGridSpec(
            num_scalar_prefetch=0,
            grid=(n_tiles,),
            in_specs=[
                pl.BlockSpec((Daug, bt), lambda i: (0, i)),    # streamed x^T tile
                full(w1), full(w2), full(b2), full(w3),        # VMEM-resident weights
            ],
            out_specs=pl.BlockSpec((1, bt), lambda i: (0, i)),  # lane-dense output
        ),
        compiler_params=pltpu.CompilerParams(
            dimension_semantics=("parallel",),      # batch tiles shard across TCs
            vmem_limit_bytes=32 * 1024 * 1024,
        ),
        cost_estimate=pl.CostEstimate(
            flops=flops, transcendentals=0, bytes_accessed=bytes_accessed),
    )(x_t, w1, w2, b2, w3)

    # TODO(synk): b3 could also live in SMEM inside the kernel; a post-kernel scalar
    # add on [B, 1] is negligible either way.
    return out_row[0, :B].reshape(B, 1) + b3


def init_params(key, input_dim=6, hidden_dim=128):
    """PyTorch nn.Linear default init (U(-1/sqrt(fan_in), +)), PyTorch weight layout."""
    ks = jax.random.split(key, 6)

    def linear(kw, kb, fan_in, fan_out):
        bound = 1.0 / jnp.sqrt(jnp.float32(fan_in))
        w = jax.random.uniform(kw, (fan_out, fan_in), jnp.float32, -bound, bound)
        b = jax.random.uniform(kb, (fan_out, 1), jnp.float32, -bound, bound)
        return w, b

    w1, b1 = linear(ks[0], ks[1], input_dim, hidden_dim)
    w2, b2 = linear(ks[2], ks[3], hidden_dim, hidden_dim)
    w3, b3 = linear(ks[4], ks[5], hidden_dim, 1)          # w3: [1, H]
    return {"w1": w1, "b1": b1, "w2": w2, "b2": b2, "w3": w3.T, "b3": b3}


def _reference(x, p):
    lrelu = lambda v: jnp.where(v >= 0, v, 0.2 * v)
    h1 = lrelu(x @ p["w1"].T + p["b1"][:, 0])
    h2 = lrelu(h1 @ p["w2"].T + p["b2"][:, 0])
    return h2 @ p["w3"] + p["b3"][0, 0]


if __name__ == "__main__":
    key = jax.random.PRNGKey(0)
    k_x, k_p = jax.random.split(key)

    B, D, H = 300, 6, 128     # B deliberately not a tile multiple (exercises padding)
    x = jax.random.normal(k_x, (B, D), jnp.float32)
    params = init_params(k_p, input_dim=D, hidden_dim=H)

    fwd_tiled = jax.jit(functools.partial(discriminator_forward, batch_tile=128))
    fwd_default = jax.jit(discriminator_forward)

    out_tiled = fwd_tiled(x, params)        # multiple grid steps
    out_default = fwd_default(x, params)    # single tile (2 tiles on v7x)
    out_tiled, out_default = jax.block_until_ready((out_tiled, out_default))

    ref = _reference(x, params)
    assert out_tiled.shape == (B, 1)
    assert out_default.shape == (B, 1)
    # bf16 MXU operands (+ bf16 elementwise on v6e/v7x) -> relaxed tolerance vs f32 ref.
    assert jnp.allclose(out_tiled, ref, atol=5e-2, rtol=5e-2), \
        float(jnp.max(jnp.abs(out_tiled - ref)))
    assert jnp.allclose(out_default, ref, atol=5e-2, rtol=5e-2), \
        float(jnp.max(jnp.abs(out_default - ref)))
    assert jnp.allclose(out_tiled, out_default, atol=1e-5, rtol=1e-5)

    print("KERNEL_OK")
</pallas_src>

<mosaic_0001>
module attributes {stable_mosaic.version = 11 : i64} {
  func.func @kernel(%arg0: i32, %arg1: memref<7x128xbf16, #tpu.memory_space<vmem>>, %arg2: memref<128x7xbf16, #tpu.memory_space<vmem>>, %arg3: memref<128x128xbf16, #tpu.memory_space<vmem>>, %arg4: memref<128x1xbf16, #tpu.memory_space<vmem>>, %arg5: memref<128x1xbf16, #tpu.memory_space<vmem>>, %arg6: memref<1x128xf32, #tpu.memory_space<vmem>>) attributes {dimension_semantics = [#tpu.dimension_semantics<parallel>], iteration_bounds = array<i64: 3>, scalar_prefetch = 0 : i64, scratch_operands = 0 : i64, tpu.core_type = #tpu.core_type<tc>, window_params = [{transform_indices = @transform_0, window_bounds = array<i64: 7, 128>}, {pipeline_mode = #tpu.pipeline_mode<synchronous>, transform_indices = @transform_1, window_bounds = array<i64: 128, 7>}, {pipeline_mode = #tpu.pipeline_mode<synchronous>, transform_indices = @transform_2, window_bounds = array<i64: 128, 128>}, {pipeline_mode = #tpu.pipeline_mode<synchronous>, transform_indices = @transform_3, window_bounds = array<i64: 128, 1>}, {pipeline_mode = #tpu.pipeline_mode<synchronous>, transform_indices = @transform_4, window_bounds = array<i64: 128, 1>}, {transform_indices = @transform_5, window_bounds = array<i64: 1, 128>}]} {
    %c0 = arith.constant 0 : index
    %c0_0 = arith.constant 0 : index
    %0 = vector.load %arg2[%c0, %c0_0] : memref<128x7xbf16, #tpu.memory_space<vmem>>, vector<128x7xbf16>
    %c0_1 = arith.constant 0 : index
    %c0_2 = arith.constant 0 : index
    %1 = vector.load %arg1[%c0_1, %c0_2] : memref<7x128xbf16, #tpu.memory_space<vmem>>, vector<7x128xbf16>
    %cst = arith.constant dense<0.000000e+00> : vector<128x128xf32>
    %2 = tpu.matmul %0, %1, %cst {dimension_numbers = #tpu.dot_dimension_numbers<[1], [0], [0], [1], [0, 0, 1, 1], [], []>} : vector<128x7xbf16>, vector<7x128xbf16>, vector<128x128xf32> -> vector<128x128xf32>
    %3 = arith.truncf %2 : vector<128x128xf32> to vector<128x128xbf16>
    %cst_3 = arith.constant 2.001950e-01 : bf16
    %4 = vector.broadcast %cst_3 : bf16 to vector<128x128xbf16>
    %5 = arith.mulf %4, %3 : vector<128x128xbf16>
    %6 = arith.maximumf %3, %5 : vector<128x128xbf16>
    %c0_4 = arith.constant 0 : index
    %c0_5 = arith.constant 0 : index
    %7 = vector.load %arg3[%c0_4, %c0_5] : memref<128x128xbf16, #tpu.memory_space<vmem>>, vector<128x128xbf16>
    %cst_6 = arith.constant dense<0.000000e+00> : vector<128x128xf32>
    %8 = tpu.matmul %7, %6, %cst_6 {dimension_numbers = #tpu.dot_dimension_numbers<[1], [0], [0], [1], [0, 0, 1, 1], [], []>} : vector<128x128xbf16>, vector<128x128xbf16>, vector<128x128xf32> -> vector<128x128xf32>
    %9 = arith.truncf %8 : vector<128x128xf32> to vector<128x128xbf16>
    %c0_7 = arith.constant 0 : index
    %c0_8 = arith.constant 0 : index
    %10 = vector.load %arg4[%c0_7, %c0_8] : memref<128x1xbf16, #tpu.memory_space<vmem>>, vector<128x1xbf16>
    %11 = vector.broadcast %10 : vector<128x1xbf16> to vector<128x128xbf16>
    %12 = arith.addf %9, %11 : vector<128x128xbf16>
    %cst_9 = arith.constant 2.001950e-01 : bf16
    %13 = vector.broadcast %cst_9 : bf16 to vector<128x128xbf16>
    %14 = arith.mulf %13, %12 : vector<128x128xbf16>
    %15 = arith.maximumf %12, %14 : vector<128x128xbf16>
    %c0_10 = arith.constant 0 : index
    %c0_11 = arith.constant 0 : index
    %16 = vector.load %arg5[%c0_10, %c0_11] : memref<128x1xbf16, #tpu.memory_space<vmem>>, vector<128x1xbf16>
    %17 = vector.broadcast %16 : vector<128x1xbf16> to vector<128x128xbf16>
    %18 = arith.mulf %15, %17 : vector<128x128xbf16>
    %19 = arith.extf %18 : vector<128x128xbf16> to vector<128x128xf32>
    %cst_12 = arith.constant dense<0.000000e+00> : vector<128xf32>
    %20 = vector.multi_reduction <add>, %19, %cst_12 [0] : vector<128x128xf32> to vector<128xf32>
    %21 = vector.shape_cast %20 : vector<128xf32> to vector<1x128xf32>
    %c0_13 = arith.constant 0 : index
    %c0_14 = arith.constant 0 : index
    %22 = vector.load %arg6[%c0_13, %c0_14] : memref<1x128xf32, #tpu.memory_space<vmem>>, vector<1x128xf32>
    tpu.vector_store %arg6[%c0_13, %c0_14], %21 {strides = array<i32>} : memref<1x128xf32, #tpu.memory_space<vmem>>, vector<1x128xf32>,
    return
  }
  func.func @transform_0(%arg0: i32) -> (i32, i32) {
    %c0_i32 = arith.constant 0 : i32
    %c0_i32_0 = arith.constant 0 : i32
    return %c0_i32, %arg0 : i32, i32
  }
  func.func @transform_1(%arg0: i32) -> (i32, i32) {
    %c0_i32 = arith.constant 0 : i32
    %c0_i32_0 = arith.constant 0 : i32
    %c0_i32_1 = arith.constant 0 : i32
    return %c0_i32, %c0_i32_0 : i32, i32
  }
  func.func @transform_2(%arg0: i32) -> (i32, i32) {
    %c0_i32 = arith.constant 0 : i32
    %c0_i32_0 = arith.constant 0 : i32
    %c0_i32_1 = arith.constant 0 : i32
    return %c0_i32, %c0_i32_0 : i32, i32
  }
  func.func @transform_3(%arg0: i32) -> (i32, i32) {
    %c0_i32 = arith.constant 0 : i32
    %c0_i32_0 = arith.constant 0 : i32
    %c0_i32_1 = arith.constant 0 : i32
    return %c0_i32, %c0_i32_0 : i32, i32
  }
  func.func @transform_4(%arg0: i32) -> (i32, i32) {
    %c0_i32 = arith.constant 0 : i32
    %c0_i32_0 = arith.constant 0 : i32
    %c0_i32_1 = arith.constant 0 : i32
    return %c0_i32, %c0_i32_0 : i32, i32
  }
  func.func @transform_5(%arg0: i32) -> (i32, i32) {
    %c0_i32 = arith.constant 0 : i32
    %c0_i32_0 = arith.constant 0 : i32
    return %c0_i32, %arg0 : i32, i32
  }
}

</mosaic_0001>

<llo_original>
// kernel: discriminator_forward.1
$region0: #{discriminator_forward.1}
  #allocation0 [shape = 'u32[]', space=smem, size = 0x4, offset = 0x4, fixed_abs, tag = 'smem constant byte address 0x4 - core index']
  #allocation1 [shape = 'u32[144,128]{1,0:T(1,128)}', space=vmem, size = 0x12000, scoped, tag = 'internal scratch']
  %s0 = inlined_call_operand.vmem [shape: bf16[7,384], index: 0, kind: input, shape index: {}]
  %s1 = inlined_call_operand.vmem [shape: bf16[128,7], index: 1, kind: input, shape index: {}]
  %s2 = inlined_call_operand.vmem [shape: bf16[128,128], index: 2, kind: input, shape index: {}]
  %s3 = inlined_call_operand.vmem [shape: bf16[128,1], index: 3, kind: input, shape index: {}]
  %s4 = inlined_call_operand.vmem [shape: bf16[128,1], index: 4, kind: input, shape index: {}]
  %s5 = inlined_call_operand.vmem [shape: f32[1,384], index: 5, kind: output, shape index: {}]
  %s6 = sld [smem:[#allocation0]]
  $region53: #{discriminator_forward.1} parent=0
    _
  %s8 = ssub.s32 1, %s6
  %s9 = scalar_select 0, %s8, %s6
  loop: start=0, step=1, limit=5
  $region2: #{discriminator_forward.1} parent=0 // loop_pre_header
    _
  $region3: #{discriminator_forward.1} parent=0 // loop_header
    %s11 = sphi 0, %s15
    %p12 = scmp.ge.s32.totalorder %s11, 5
    %s21 = sphi 0, %s23
    %s24 = sphi 0, %s21
    %s25 = sphi 0, %s24
    %s41 = sphi 0, %s25
    %s45 = sphi 0, %s45
    %s47 = sphi 0, %s45
    %s48 = sphi 0, %s47
    %s62 = sphi 0, %s48
    %s66 = sphi 0, %s66
    %s68 = sphi 0, %s66
    %s69 = sphi 0, %s68
    %s83 = sphi 0, %s69
    %s87 = sphi 0, %s87
    %s89 = sphi 0, %s87
    %s90 = sphi 0, %s89
    %s104 = sphi 0, %s90
    %s108 = sphi 0, %s108
    %s110 = sphi 0, %s108
    %s111 = sphi 0, %s110
    %s125 = sphi 0, %s111
    %s131 = sphi 0, %s133
    %s134 = sphi 0, %s131
    %s135 = sphi 0, %s134
    %s151 = sphi 0, %s135
  $region4: #{discriminator_forward.1} parent=0 // loop_header_branch
    %14 = sbr.rel (%p12) target = $region8
  $region5: #{discriminator_forward.1} parent=0 // loop_body
    %s16 = ssub.s32 %s11, 1
    %s17 = ssub.s32 %s11, 2
    %s18 = sadd.s32 %s11, 1
    %s19 = ssub.s32 %s11, %s18
    %p20 = scmp.eq.s32.totalorder %s19, 0
    %s22 = sadd.s32 %s21, 1
    %s23 = scalar_select %p20, %s21, %s22
    %p26 = pneg %p20
    %p27 = scmp.eq.s32.totalorder %s11, 2
    %p28 = por %p26, %p27
    %p29 = scmp.ne.s32.totalorder %s21, %s24
    %p30 = scmp.eq.s32.totalorder %s11, 0
    %p31 = por %p29, %p30
    %p32 = scmp.ne.s32.totalorder %s21, %s24
    %p33 = scmp.eq.s32.totalorder %s16, 2
    %p34 = por %p32, %p33
    %p35 = scmp.ne.s32.totalorder %s24, %s25
    %p36 = scmp.eq.s32.totalorder %s16, 0
    %p37 = por %p35, %p36
    %p38 = scmp.ne.s32.totalorder %s24, %s25
    %p39 = scmp.eq.s32.totalorder %s17, 2
    %p40 = por %p38, %p39
    %p42 = scmp.ne.s32.totalorder %s25, %s41
    %p43 = scmp.eq.s32.totalorder %s17, 0
    %p44 = por %p42, %p43
    %s46 = sadd.s32 %s45, 1
    %p49 = scmp.eq.s32.totalorder %s11, 2
    %p50 = scmp.ne.s32.totalorder %s45, %s47
    %p51 = scmp.eq.s32.totalorder %s11, 0
    %p52 = por %p50, %p51
    %p53 = scmp.ne.s32.totalorder %s45, %s47
    %p54 = scmp.eq.s32.totalorder %s16, 2
    %p55 = por %p53, %p54
    %p56 = scmp.ne.s32.totalorder %s47, %s48
    %p57 = scmp.eq.s32.totalorder %s16, 0
    %p58 = por %p56, %p57
    %p59 = scmp.ne.s32.totalorder %s47, %s48
    %p60 = scmp.eq.s32.totalorder %s17, 2
    %p61 = por %p59, %p60
    %p63 = scmp.ne.s32.totalorder %s48, %s62
    %p64 = scmp.eq.s32.totalorder %s17, 0
    %p65 = por %p63, %p64
    %s67 = sadd.s32 %s66, 1
    %p70 = scmp.eq.s32.totalorder %s11, 2
    %p71 = scmp.ne.s32.totalorder %s66, %s68
    %p72 = scmp.eq.s32.totalorder %s11, 0
    %p73 = por %p71, %p72
    %p74 = scmp.ne.s32.totalorder %s66, %s68
    %p75 = scmp.eq.s32.totalorder %s16, 2
    %p76 = por %p74, %p75
    %p77 = scmp.ne.s32.totalorder %s68, %s69
    %p78 = scmp.eq.s32.totalorder %s16, 0
    %p79 = por %p77, %p78
    %p80 = scmp.ne.s32.totalorder %s68, %s69
    %p81 = scmp.eq.s32.totalorder %s17, 2
    %p82 = por %p80, %p81
    %p84 = scmp.ne.s32.totalorder %s69, %s83
    %p85 = scmp.eq.s32.totalorder %s17, 0
    %p86 = por %p84, %p85
    %s88 = sadd.s32 %s87, 1
    %p91 = scmp.eq.s32.totalorder %s11, 2
    %p92 = scmp.ne.s32.totalorder %s87, %s89
    %p93 = scmp.eq.s32.totalorder %s11, 0
    %p94 = por %p92, %p93
    %p95 = scmp.ne.s32.totalorder %s87, %s89
    %p96 = scmp.eq.s32.totalorder %s16, 2
    %p97 = por %p95, %p96
    %p98 = scmp.ne.s32.totalorder %s89, %s90
    %p99 = scmp.eq.s32.totalorder %s16, 0
    %p100 = por %p98, %p99
    %p101 = scmp.ne.s32.totalorder %s89, %s90
    %p102 = scmp.eq.s32.totalorder %s17, 2
    %p103 = por %p101, %p102
    %p105 = scmp.ne.s32.totalorder %s90, %s104
    %p106 = scmp.eq.s32.totalorder %s17, 0
    %p107 = por %p105, %p106
    %s109 = sadd.s32 %s108, 1
    %p112 = scmp.eq.s32.totalorder %s11, 2
    %p113 = scmp.ne.s32.totalorder %s108, %s110
    %p114 = scmp.eq.s32.totalorder %s11, 0
    %p115 = por %p113, %p114
    %p116 = scmp.ne.s32.totalorder %s108, %s110
    %p117 = scmp.eq.s32.totalorder %s16, 2
    %p118 = por %p116, %p117
    %p119 = scmp.ne.s32.totalorder %s110, %s111
    %p120 = scmp.eq.s32.totalorder %s16, 0
    %p121 = por %p119, %p120
    %p122 = scmp.ne.s32.totalorder %s110, %s111
    %p123 = scmp.eq.s32.totalorder %s17, 2
    %p124 = por %p122, %p123
    %p126 = scmp.ne.s32.totalorder %s111, %s125
    %p127 = scmp.eq.s32.totalorder %s17, 0
    %p128 = por %p126, %p127
    %s129 = ssub.s32 %s11, %s18
    %p130 = scmp.eq.s32.totalorder %s129, 0
    %s132 = sadd.s32 %s131, 1
    %s133 = scalar_select %p130, %s131, %s132
    %p136 = pneg %p130
    %p137 = scmp.eq.s32.totalorder %s11, 2
    %p138 = por %p136, %p137
    %p139 = scmp.ne.s32.totalorder %s131, %s134
    %p140 = scmp.eq.s32.totalorder %s11, 0
    %p141 = por %p139, %p140
    %p142 = scmp.ne.s32.totalorder %s131, %s134
    %p143 = scmp.eq.s32.totalorder %s16, 2
    %p144 = por %p142, %p143
    %p145 = scmp.ne.s32.totalorder %s134, %s135
    %p146 = scmp.eq.s32.totalorder %s16, 0
    %p147 = por %p145, %p146
    %p148 = scmp.ne.s32.totalorder %s134, %s135
    %p149 = scmp.eq.s32.totalorder %s17, 2
    %p150 = por %p148, %p149
    %p152 = scmp.ne.s32.totalorder %s135, %s151
    %p153 = scmp.eq.s32.totalorder %s17, 0
    %p154 = por %p152, %p153
    %p155 = scmp.le.s32.totalorder 1, %s11
    %p156 = scmp.lt.s32.totalorder %s11, 4
    %p157 = pnand %p155, %p156
    %p158 = pneg %p157
    // Predicated region
    $region9: #{discriminator_forward.1} parent=5 // pred_check
      _
    $region10: #{discriminator_forward.1} parent=5 // pred_check_branch
      %160 = sbr.rel (%p157) target = $region12
    $region11: #{discriminator_forward.1} parent=5 // pred_region
      %s161 = ssub.s32 %s11, 1
      // Predicated region
      $region13: #{discriminator_forward.1} parent=11 // pred_check
        %p162 = pneg %p58
      $region14: #{discriminator_forward.1} parent=11 // pred_check_branch
        %164 = sbr.rel (%p162) target = $region16
      $region15: #{discriminator_forward.1} parent=11 // pred_region
        _
      $region16: #{discriminator_forward.1} parent=11 // pred_fallthru
        _
      // Predicated region
      $region17: #{discriminator_forward.1} parent=11 // pred_check
        %p165 = pneg %p79
      $region18: #{discriminator_forward.1} parent=11 // pred_check_branch
        %167 = sbr.rel (%p165) target = $region20
      $region19: #{discriminator_forward.1} parent=11 // pred_region
        _
      $region20: #{discriminator_forward.1} parent=11 // pred_fallthru
        _
      // Predicated region
      $region21: #{discriminator_forward.1} parent=11 // pred_check
        %p168 = pneg %p100
      $region22: #{discriminator_forward.1} parent=11 // pred_check_branch
        %170 = sbr.rel (%p168) target = $region24
      $region23: #{discriminator_forward.1} parent=11 // pred_region
        _
      $region24: #{discriminator_forward.1} parent=11 // pred_fallthru
        _
      // Predicated region
      $region25: #{discriminator_forward.1} parent=11 // pred_check
        %p171 = pneg %p121
      $region26: #{discriminator_forward.1} parent=11 // pred_check_branch
        %173 = sbr.rel (%p171) target = $region28
      $region27: #{discriminator_forward.1} parent=11 // pred_region
        _
      $region28: #{discriminator_forward.1} parent=11 // pred_fallthru
        _
    $region12: #{discriminator_forward.1} parent=5 // pred_fallthru
      _
    %p174 = scmp.lt.s32.totalorder %s11, 3
    // Predicated region
    $region29: #{discriminator_forward.1} parent=5 // pred_check
      %p175 = pneg %p174
    $region30: #{discriminator_forward.1} parent=5 // pred_check_branch
      %177 = sbr.rel (%p175) target = $region32
    $region31: #{discriminator_forward.1} parent=5 // pred_region
      // Predicated region
      $region33: #{discriminator_forward.1} parent=31 // pred_check
        %p178 = pneg %p31
      $region34: #{discriminator_forward.1} parent=31 // pred_check_branch
        %180 = sbr.rel (%p178) target = $region36
      $region35: #{discriminator_forward.1} parent=31 // pred_region
        %p181 = scmp.lt.s32.totalorder %s11, 2
        %s182 = scalar_select %p181, %s11, 2
        %s183 = smul.addr %s182, 4
        %s184 = scalar_lea.vmem %s0, %s183
      $region36: #{discriminator_forward.1} parent=31 // pred_fallthru
        _
    $region32: #{discriminator_forward.1} parent=5 // pred_fallthru
      _
    %p185 = scmp.le.s32.totalorder 1, %s11
    %p186 = scmp.lt.s32.totalorder %s11, 4
    %p187 = pnand %p185, %p186
    %p188 = pneg %p187
    // Predicated region
    $region37: #{discriminator_forward.1} parent=5 // pred_check
      _
    $region38: #{discriminator_forward.1} parent=5 // pred_check_branch
      %190 = sbr.rel (%p187) target = $region40
    $region39: #{discriminator_forward.1} parent=5 // pred_region
      %s191 = ssub.s32 %s11, 1
      %p192 = scmp.lt.s32.totalorder %s16, 2
      %s193 = scalar_select %p192, %s16, 2
      %s194 = smul.addr %s193, 4
      %s195 = scalar_lea.vmem %s0, %s194
      %p196 = pneg %p37
      %p197 = pneg %p34
      %p198 = pneg %p58
      %p199 = pneg %p55
      %p200 = pneg %p79
      %p201 = pneg %p76
      %p202 = pneg %p100
      %p203 = pneg %p97
      %p204 = pneg %p121
      %p205 = pneg %p118
      %p206 = pneg %p147
      %p207 = pneg %p144
      %p208 = scmp.lt.s32.totalorder %s16, 2
      %s209 = scalar_select %p208, %s16, 2
      %s210 = scalar_lea.vmem %s5, %s209
      %p211 = scmp.lt.s32.totalorder %s16, 2
      %s212 = scalar_select %p211, %s16, 2
      %s213 = smul.addr %s212, 4
      %s214 = scalar_lea.vmem %s0, %s213
      %p215 = scmp.lt.s32.totalorder %s16, 2
      %s216 = scalar_select %p215, %s16, 2
      %s217 = scalar_lea.vmem %s5, %s216
      %v220 = vld [vmem:[%s1] sm:$0xf]
      %v221 = vld [vmem:[%s1 + $0x4] sm:$0xf]
      %v222 = vld [vmem:[%s1 + $0x8] sm:$0xf]
      %v223 = vld [vmem:[%s1 + $0xc] sm:$0xf]
      %v224 = vld [vmem:[%s1 + $0x10] sm:$0xf]
      %v225 = vld [vmem:[%s1 + $0x14] sm:$0xf]
      %v226 = vld [vmem:[%s1 + $0x18] sm:$0xf]
      %v227 = vld [vmem:[%s1 + $0x1c] sm:$0xf]
      %v228 = vld [vmem:[%s1 + $0x20] sm:$0xf]
      %v229 = vld [vmem:[%s1 + $0x24] sm:$0xf]
      %v230 = vld [vmem:[%s1 + $0x28] sm:$0xf]
      %v231 = vld [vmem:[%s1 + $0x2c] sm:$0xf]
      %v232 = vld [vmem:[%s1 + $0x30] sm:$0xf]
      %v233 = vld [vmem:[%s1 + $0x34] sm:$0xf]
      %v234 = vld [vmem:[%s1 + $0x38] sm:$0xf]
      %v235 = vld [vmem:[%s1 + $0x3c] sm:$0xf]
      %v236 = vld [vmem:[%s214] sm:$0xf]
      %v253 = vunpack.c.l.b16 %v220
      %v254 = vunpack.c.l.b16 %v221
      %v255 = vunpack.c.l.b16 %v222
      %v256 = vunpack.c.l.b16 %v223
      %v257 = vunpack.c.l.b16 %v224
      %v258 = vunpack.c.l.b16 %v225
      %v259 = vunpack.c.l.b16 %v226
      %v260 = vunpack.c.l.b16 %v227
      %v261 = vunpack.c.l.b16 %v228
      %v262 = vunpack.c.l.b16 %v229
      %v263 = vunpack.c.l.b16 %v230
      %v264 = vunpack.c.l.b16 %v231
      %v265 = vunpack.c.l.b16 %v232
      %v266 = vunpack.c.l.b16 %v233
      %v267 = vunpack.c.l.b16 %v234
      %v268 = vunpack.c.l.b16 %v235
      %v269 = vpack.c.b16 %v254, %v253
      %v270 = vpack.c.b16 %v256, %v255
      %v271 = vpack.c.b16 %v258, %v257
      %v272 = vpack.c.b16 %v260, %v259
      %v273 = vpack.c.b16 %v262, %v261
      %v274 = vpack.c.b16 %v264, %v263
      %v275 = vpack.c.b16 %v266, %v265
      %v276 = vpack.c.b16 %v268, %v267
      %vm277 = vcmask 56320
      %v279 = vsel %vm277, %v269, 0
      %v282 = vsel %vm277, %v270, 0
      %v285 = vsel %vm277, %v271, 0
      %v288 = vsel %vm277, %v272, 0
      %v291 = vsel %vm277, %v273, 0
      %v294 = vsel %vm277, %v274, 0
      %v297 = vsel %vm277, %v275, 0
      %v300 = vsel %vm277, %v276, 0
      %vm302 = vcmask 1042432
      %vm303 = vcmask 1043456
      %v304 = vsel %vm302, 4294967295, 65535
      %v305 = vsel %vm303, %v304, 0
      %v307 = vand.u32 %v236, %v305
      %309 = vmatprep.subr.bf16.mxu0 0
      %310 = vmatpush1.bf16.msra.mxu0 0
      %311 = vmatprep.subr.bf16.mxu0 0
      %312 = vmatpush1.bf16.msra.mxu0 0
      %313 = vmatprep.subr.bf16.mxu0 0
      %314 = vmatpush1.bf16.msra.mxu0 0
      %315 = vmatprep.subr.bf16.mxu0 0
      %316 = vmatpush1.bf16.msra.mxu0 0
      %317 = vmatprep.subr.bf16.mxu0 0
      %318 = vmatpush1.bf16.msra.mxu0 0
      %319 = vmatprep.subr.bf16.mxu0 0
      %320 = vmatpush1.bf16.msra.mxu0 0
      %321 = vmatprep.subr.bf16.mxu0 0
      %322 = vmatpush1.bf16.msra.mxu0 0
      %323 = vmatprep.subr.bf16.mxu0 0
      %324 = vmatpush1.bf16.msra.mxu0 %v307
      %325 = vmatprep.subr.bf16.mxu0 0
      %326 = vmatpush2.bf16.msra.mxu0 0
      %327 = vmatprep.subr.bf16.mxu0 0
      %328 = vmatpush2.bf16.msra.mxu0 0
      %329 = vmatprep.subr.bf16.mxu0 0
      %330 = vmatpush2.bf16.msra.mxu0 0
      %331 = vmatprep.subr.bf16.mxu0 0
      %332 = vmatpush2.bf16.msra.mxu0 0
      %333 = vmatprep.subr.bf16.mxu0 0
      %334 = vmatpush2.bf16.msra.mxu0 0
      %335 = vmatprep.subr.bf16.mxu0 0
      %336 = vmatpush2.bf16.msra.mxu0 0
      %337 = vmatprep.subr.bf16.mxu0 0
      %338 = vmatpush2.bf16.msra.mxu0 0
      %339 = vmatprep.subr.bf16.mxu0 0
      %340 = vmatpush2.bf16.msra.mxu0 0
      %341 = vmatprep.mubr.bf16.mxu0 0
      %342 = vmatmul.mubr.bf16.gmra.mxu0 %v279
      %v343 = vpop.f32.mrf.mxu0
      %v344 = vadd.f32 0.0, %v343
      %v345 = vpop.f32.mrf.mxu0
      %v346 = vpop.f32.mrf.mxu0
      %v347 = vadd.f32 0.0, %v346
      %v348 = vpop.f32.mrf.mxu0
      %349 = vmatprep.mubr.bf16.mxu0 0
      %350 = vmatmul.mubr.bf16.gmra.mxu0 %v282
      %v351 = vpop.f32.mrf.mxu0
      %v352 = vadd.f32 0.0, %v351
      %v353 = vpop.f32.mrf.mxu0
      %v354 = vpop.f32.mrf.mxu0
      %v355 = vadd.f32 0.0, %v354
      %v356 = vpop.f32.mrf.mxu0
      %357 = vmatprep.mubr.bf16.mxu0 0
      %358 = vmatmul.mubr.bf16.gmra.mxu0 %v285
      %v359 = vpop.f32.mrf.mxu0
      %v360 = vadd.f32 0.0, %v359
      %v361 = vpop.f32.mrf.mxu0
      %v362 = vpop.f32.mrf.mxu0
      %v363 = vadd.f32 0.0, %v362
      %v364 = vpop.f32.mrf.mxu0
      %365 = vmatprep.mubr.bf16.mxu0 0
      %366 = vmatmul.mubr.bf16.gmra.mxu0 %v288
      %v367 = vpop.f32.mrf.mxu0
      %v368 = vadd.f32 0.0, %v367
      %v369 = vpop.f32.mrf.mxu0
      %v370 = vpop.f32.mrf.mxu0
      %v371 = vadd.f32 0.0, %v370
      %v372 = vpop.f32.mrf.mxu0
      %373 = vmatprep.mubr.bf16.mxu0 0
      %374 = vmatmul.mubr.bf16.gmra.mxu0 %v291
      %v375 = vpop.f32.mrf.mxu0
      %v376 = vadd.f32 0.0, %v375
      %v377 = vpop.f32.mrf.mxu0
      %v378 = vpop.f32.mrf.mxu0
      %v379 = vadd.f32 0.0, %v378
      %v380 = vpop.f32.mrf.mxu0
      %381 = vmatprep.mubr.bf16.mxu0 0
      %382 = vmatmul.mubr.bf16.gmra.mxu0 %v294
      %v383 = vpop.f32.mrf.mxu0
      %v384 = vadd.f32 0.0, %v383
      %v385 = vpop.f32.mrf.mxu0
      %v386 = vpop.f32.mrf.mxu0
      %v387 = vadd.f32 0.0, %v386
      %v388 = vpop.f32.mrf.mxu0
      %389 = vmatprep.mubr.bf16.mxu0 0
      %390 = vmatmul.mubr.bf16.gmra.mxu0 %v297
      %v391 = vpop.f32.mrf.mxu0
      %v392 = vadd.f32 0.0, %v391
      %v393 = vpop.f32.mrf.mxu0
      %v394 = vpop.f32.mrf.mxu0
      %v395 = vadd.f32 0.0, %v394
      %v396 = vpop.f32.mrf.mxu0
      %397 = vmatprep.mubr.bf16.mxu0 0
      %398 = vmatmul.mubr.bf16.gmra.mxu0 %v300
      %v399 = vpop.f32.mrf.mxu0
      %v400 = vadd.f32 0.0, %v399
      %v401 = vpop.f32.mrf.mxu0
      %v402 = vpop.f32.mrf.mxu0
      %v403 = vadd.f32 0.0, %v402
      %v404 = vpop.f32.mrf.mxu0
      %405 = vdwg.mxu0
      %v406 = vpack.c.bf16 %v347, %v344
      %v407 = vpack.c.bf16 %v355, %v352
      %v408 = vpack.c.bf16 %v363, %v360
      %v409 = vpack.c.bf16 %v371, %v368
      %v410 = vpack.c.bf16 %v379, %v376
      %v411 = vpack.c.bf16 %v387, %v384
      %v412 = vpack.c.bf16 %v395, %v392
      %v413 = vpack.c.bf16 %v403, %v400
      %v414 = vmul.bf16 %v406, 1045249613
      %v415 = vmul.bf16 %v407, 1045249613
      %v416 = vmul.bf16 %v408, 1045249613
      %v417 = vmul.bf16 %v409, 1045249613
      %v418 = vmul.bf16 %v410, 1045249613
      %v419 = vmul.bf16 %v411, 1045249613
      %v420 = vmul.bf16 %v412, 1045249613
      %v421 = vmul.bf16 %v413, 1045249613
      %v422 = vmax.bf16 %v406, %v414
      %v423 = vmax.bf16 %v407, %v415
      %v424 = vmax.bf16 %v408, %v416
      %v425 = vmax.bf16 %v409, %v417
      %v426 = vmax.bf16 %v410, %v418
      %v427 = vmax.bf16 %v411, %v419
      %v428 = vmax.bf16 %v412, %v420
      %v429 = vmax.bf16 %v413, %v421
      %v430 = vld [vmem:[%s2] sm:$0xf]
      %v431 = vld [vmem:[%s2 + $0x4] sm:$0xf]
      %v432 = vld [vmem:[%s2 + $0x8] sm:$0xf]
      %v433 = vld [vmem:[%s2 + $0xc] sm:$0xf]
      %v434 = vld [vmem:[%s2 + $0x10] sm:$0xf]
      %v435 = vld [vmem:[%s2 + $0x14] sm:$0xf]
      %v436 = vld [vmem:[%s2 + $0x18] sm:$0xf]
      %v437 = vld [vmem:[%s2 + $0x1c] sm:$0xf]
      %v438 = vld [vmem:[%s2 + $0x20] sm:$0xf]
      %v439 = vld [vmem:[%s2 + $0x24] sm:$0xf]
      %v440 = vld [vmem:[%s2 + $0x28] sm:$0xf]
      %v441 = vld [vmem:[%s2 + $0x2c] sm:$0xf]
      %v442 = vld [vmem:[%s2 + $0x30] sm:$0xf]
      %v443 = vld [vmem:[%s2 + $0x34] sm:$0xf]
      %v444 = vld [vmem:[%s2 + $0x38] sm:$0xf]
      %v445 = vld [vmem:[%s2 + $0x3c] sm:$0xf]
      %v462 = vunpack.c.l.b16 %v430
      %v463 = vunpack.c.l.b16 %v431
      %v464 = vunpack.c.l.b16 %v432
      %v465 = vunpack.c.l.b16 %v433
      %v466 = vunpack.c.l.b16 %v434
      %v467 = vunpack.c.l.b16 %v435
      %v468 = vunpack.c.l.b16 %v436
      %v469 = vunpack.c.l.b16 %v437
      %v470 = vunpack.c.l.b16 %v438
      %v471 = vunpack.c.l.b16 %v439
      %v472 = vunpack.c.l.b16 %v440
      %v473 = vunpack.c.l.b16 %v441
      %v474 = vunpack.c.l.b16 %v442
      %v475 = vunpack.c.l.b16 %v443
      %v476 = vunpack.c.l.b16 %v444
      %v477 = vunpack.c.l.b16 %v445
      %v478 = vpack.c.b16 %v463, %v462
      %v479 = vpack.c.b16 %v465, %v464
      %v480 = vpack.c.b16 %v467, %v466
      %v481 = vpack.c.b16 %v469, %v468
      %v482 = vpack.c.b16 %v471, %v470
      %v483 = vpack.c.b16 %v473, %v472
      %v484 = vpack.c.b16 %v475, %v474
      %v485 = vpack.c.b16 %v477, %v476
      %494 = vmatprep.subr.bf16.mxu0 0
      %495 = vmatpush1.bf16.msra.mxu0 %v429
      %496 = vmatprep.subr.bf16.mxu0 0
      %497 = vmatpush1.bf16.msra.mxu0 %v428
      %498 = vmatprep.subr.bf16.mxu0 0
      %499 = vmatpush1.bf16.msra.mxu0 %v427
      %500 = vmatprep.subr.bf16.mxu0 0
      %501 = vmatpush1.bf16.msra.mxu0 %v426
      %502 = vmatprep.subr.bf16.mxu0 0
      %503 = vmatpush1.bf16.msra.mxu0 %v425
      %504 = vmatprep.subr.bf16.mxu0 0
      %505 = vmatpush1.bf16.msra.mxu0 %v424
      %506 = vmatprep.subr.bf16.mxu0 0
      %507 = vmatpush1.bf16.msra.mxu0 %v423
      %508 = vmatprep.subr.bf16.mxu0 0
      %509 = vmatpush1.bf16.msra.mxu0 %v422
      %510 = vmatprep.subr.bf16.mxu0 0
      %511 = vmatpush2.bf16.msra.mxu0 0
      %512 = vmatprep.subr.bf16.mxu0 0
      %513 = vmatpush2.bf16.msra.mxu0 0
      %514 = vmatprep.subr.bf16.mxu0 0
      %515 = vmatpush2.bf16.msra.mxu0 0
      %516 = vmatprep.subr.bf16.mxu0 0
      %517 = vmatpush2.bf16.msra.mxu0 0
      %518 = vmatprep.subr.bf16.mxu0 0
      %519 = vmatpush2.bf16.msra.mxu0 0
      %520 = vmatprep.subr.bf16.mxu0 0
      %521 = vmatpush2.bf16.msra.mxu0 0
      %522 = vmatprep.subr.bf16.mxu0 0
      %523 = vmatpush2.bf16.msra.mxu0 0
      %524 = vmatprep.subr.bf16.mxu0 0
      %525 = vmatpush2.bf16.msra.mxu0 0
      %526 = vmatprep.mubr.bf16.mxu0 0
      %527 = vmatmul.mubr.bf16.gmra.mxu0 %v478
      %v528 = vpop.f32.mrf.mxu0
      %v529 = vadd.f32 0.0, %v528
      %v530 = vpop.f32.mrf.mxu0
      %v531 = vpop.f32.mrf.mxu0
      %v532 = vadd.f32 0.0, %v531
      %v533 = vpop.f32.mrf.mxu0
      %534 = vmatprep.mubr.bf16.mxu0 0
      %535 = vmatmul.mubr.bf16.gmra.mxu0 %v479
      %v536 = vpop.f32.mrf.mxu0
      %v537 = vadd.f32 0.0, %v536
      %v538 = vpop.f32.mrf.mxu0
      %v539 = vpop.f32.mrf.mxu0
      %v540 = vadd.f32 0.0, %v539
      %v541 = vpop.f32.mrf.mxu0
      %542 = vmatprep.mubr.bf16.mxu0 0
      %543 = vmatmul.mubr.bf16.gmra.mxu0 %v480
      %v544 = vpop.f32.mrf.mxu0
      %v545 = vadd.f32 0.0, %v544
      %v546 = vpop.f32.mrf.mxu0
      %v547 = vpop.f32.mrf.mxu0
      %v548 = vadd.f32 0.0, %v547
      %v549 = vpop.f32.mrf.mxu0
      %550 = vmatprep.mubr.bf16.mxu0 0
      %551 = vmatmul.mubr.bf16.gmra.mxu0 %v481
      %v552 = vpop.f32.mrf.mxu0
      %v553 = vadd.f32 0.0, %v552
      %v554 = vpop.f32.mrf.mxu0
      %v555 = vpop.f32.mrf.mxu0
      %v556 = vadd.f32 0.0, %v555
      %v557 = vpop.f32.mrf.mxu0
      %558 = vmatprep.mubr.bf16.mxu0 0
      %559 = vmatmul.mubr.bf16.gmra.mxu0 %v482
      %v560 = vpop.f32.mrf.mxu0
      %v561 = vadd.f32 0.0, %v560
      %v562 = vpop.f32.mrf.mxu0
      %v563 = vpop.f32.mrf.mxu0
      %v564 = vadd.f32 0.0, %v563
      %v565 = vpop.f32.mrf.mxu0
      %566 = vmatprep.mubr.bf16.mxu0 0
      %567 = vmatmul.mubr.bf16.gmra.mxu0 %v483
      %v568 = vpop.f32.mrf.mxu0
      %v569 = vadd.f32 0.0, %v568
      %v570 = vpop.f32.mrf.mxu0
      %v571 = vpop.f32.mrf.mxu0
      %v572 = vadd.f32 0.0, %v571
      %v573 = vpop.f32.mrf.mxu0
      %574 = vmatprep.mubr.bf16.mxu0 0
      %575 = vmatmul.mubr.bf16.gmra.mxu0 %v484
      %v576 = vpop.f32.mrf.mxu0
      %v577 = vadd.f32 0.0, %v576
      %v578 = vpop.f32.mrf.mxu0
      %v579 = vpop.f32.mrf.mxu0
      %v580 = vadd.f32 0.0, %v579
      %v581 = vpop.f32.mrf.mxu0
      %582 = vmatprep.mubr.bf16.mxu0 0
      %583 = vmatmul.mubr.bf16.gmra.mxu0 %v485
      %v584 = vpop.f32.mrf.mxu0
      %v585 = vadd.f32 0.0, %v584
      %v586 = vpop.f32.mrf.mxu0
      %v587 = vpop.f32.mrf.mxu0
      %v588 = vadd.f32 0.0, %v587
      %v589 = vpop.f32.mrf.mxu0
      %590 = vdwg.mxu0
      %v591 = vpack.c.bf16 %v532, %v529
      %v592 = vpack.c.bf16 %v540, %v537
      %v593 = vpack.c.bf16 %v548, %v545
      %v594 = vpack.c.bf16 %v556, %v553
      %v595 = vpack.c.bf16 %v564, %v561
      %v596 = vpack.c.bf16 %v572, %v569
      %v597 = vpack.c.bf16 %v580, %v577
      %v598 = vpack.c.bf16 %v588, %v585
      %v599 = vld [vmem:[%s3] sm:$0xf]
      %v600 = vld [vmem:[%s3 + $0x4] sm:$0xf]
      %v601 = vld [vmem:[%s3 + $0x8] sm:$0xf]
      %v602 = vld [vmem:[%s3 + $0xc] sm:$0xf]
      %v603 = vld [vmem:[%s3 + $0x10] sm:$0xf]
      %v604 = vld [vmem:[%s3 + $0x14] sm:$0xf]
      %v605 = vld [vmem:[%s3 + $0x18] sm:$0xf]
      %v606 = vld [vmem:[%s3 + $0x1c] sm:$0xf]
      %v607 = vld [vmem:[%s3 + $0x20] sm:$0xf]
      %v608 = vld [vmem:[%s3 + $0x24] sm:$0xf]
      %v609 = vld [vmem:[%s3 + $0x28] sm:$0xf]
      %v610 = vld [vmem:[%s3 + $0x2c] sm:$0xf]
      %v611 = vld [vmem:[%s3 + $0x30] sm:$0xf]
      %v612 = vld [vmem:[%s3 + $0x34] sm:$0xf]
      %v613 = vld [vmem:[%s3 + $0x38] sm:$0xf]
      %v614 = vld [vmem:[%s3 + $0x3c] sm:$0xf]
      %616 = vset.pattern.permute.xlu0 0
      %617 = vperm.xlu0 %616, %v599
      %v618 = vpop.permute.xlu0 %617
      %v621 = vunpack.c.l.s4 839922192
      %v622 = vunpack.c.0.s8 %v621
      %v623 = vlaneseq
      %v624 = vshrl.u32 %v623, 7
      %v625 = vsub.s32 %v622, %v624
      %v626 = vrot.slane %v618, %v625
      %628 = vset.pattern.permute.xlu0 0
      %629 = vperm.xlu0 %628, %v600
      %v630 = vpop.permute.xlu0 %629
      %v633 = vunpack.c.l.s4 839922192
      %v634 = vunpack.c.0.s8 %v633
      %v635 = vlaneseq
      %v636 = vshrl.u32 %v635, 7
      %v637 = vsub.s32 %v634, %v636
      %v638 = vrot.slane %v630, %v637
      %640 = vset.pattern.permute.xlu0 0
      %641 = vperm.xlu0 %640, %v601
      %v642 = vpop.permute.xlu0 %641
      %v645 = vunpack.c.l.s4 839922192
      %v646 = vunpack.c.0.s8 %v645
      %v647 = vlaneseq
      %v648 = vshrl.u32 %v647, 7
      %v649 = vsub.s32 %v646, %v648
      %v650 = vrot.slane %v642, %v649
      %652 = vset.pattern.permute.xlu0 0
      %653 = vperm.xlu0 %652, %v602
      %v654 = vpop.permute.xlu0 %653
      %v657 = vunpack.c.l.s4 839922192
      %v658 = vunpack.c.0.s8 %v657
      %v659 = vlaneseq
      %v660 = vshrl.u32 %v659, 7
      %v661 = vsub.s32 %v658, %v660
      %v662 = vrot.slane %v654, %v661
      %664 = vset.pattern.permute.xlu0 0
      %665 = vperm.xlu0 %664, %v603
      %v666 = vpop.permute.xlu0 %665
      %v669 = vunpack.c.l.s4 839922192
      %v670 = vunpack.c.0.s8 %v669
      %v671 = vlaneseq
      %v672 = vshrl.u32 %v671, 7
      %v673 = vsub.s32 %v670, %v672
      %v674 = vrot.slane %v666, %v673
      %676 = vset.pattern.permute.xlu0 0
      %677 = vperm.xlu0 %676, %v604
      %v678 = vpop.permute.xlu0 %677
      %v681 = vunpack.c.l.s4 839922192
      %v682 = vunpack.c.0.s8 %v681
      %v683 = vlaneseq
      %v684 = vshrl.u32 %v683, 7
      %v685 = vsub.s32 %v682, %v684
      %v686 = vrot.slane %v678, %v685
      %688 = vset.pattern.permute.xlu0 0
      %689 = vperm.xlu0 %688, %v605
      %v690 = vpop.permute.xlu0 %689
      %v693 = vunpack.c.l.s4 839922192
      %v694 = vunpack.c.0.s8 %v693
      %v695 = vlaneseq
      %v696 = vshrl.u32 %v695, 7
      %v697 = vsub.s32 %v694, %v696
      %v698 = vrot.slane %v690, %v697
      %700 = vset.pattern.permute.xlu0 0
      %701 = vperm.xlu0 %700, %v606
      %v702 = vpop.permute.xlu0 %701
      %v705 = vunpack.c.l.s4 839922192
      %v706 = vunpack.c.0.s8 %v705
      %v707 = vlaneseq
      %v708 = vshrl.u32 %v707, 7
      %v709 = vsub.s32 %v706, %v708
      %v710 = vrot.slane %v702, %v709
      %712 = vset.pattern.permute.xlu0 0
      %713 = vperm.xlu0 %712, %v607
      %v714 = vpop.permute.xlu0 %713
      %v717 = vunpack.c.l.s4 839922192
      %v718 = vunpack.c.0.s8 %v717
      %v719 = vlaneseq
      %v720 = vshrl.u32 %v719, 7
      %v721 = vsub.s32 %v718, %v720
      %v722 = vrot.slane %v714, %v721
      %724 = vset.pattern.permute.xlu0 0
      %725 = vperm.xlu0 %724, %v608
      %v726 = vpop.permute.xlu0 %725
      %v729 = vunpack.c.l.s4 839922192
      %v730 = vunpack.c.0.s8 %v729
      %v731 = vlaneseq
      %v732 = vshrl.u32 %v731, 7
      %v733 = vsub.s32 %v730, %v732
      %v734 = vrot.slane %v726, %v733
      %736 = vset.pattern.permute.xlu0 0
      %737 = vperm.xlu0 %736, %v609
      %v738 = vpop.permute.xlu0 %737
      %v741 = vunpack.c.l.s4 839922192
      %v742 = vunpack.c.0.s8 %v741
      %v743 = vlaneseq
      %v744 = vshrl.u32 %v743, 7
      %v745 = vsub.s32 %v742, %v744
      %v746 = vrot.slane %v738, %v745
      %748 = vset.pattern.permute.xlu0 0
      %749 = vperm.xlu0 %748, %v610
      %v750 = vpop.permute.xlu0 %749
      %v753 = vunpack.c.l.s4 839922192
      %v754 = vunpack.c.0.s8 %v753
      %v755 = vlaneseq
      %v756 = vshrl.u32 %v755, 7
      %v757 = vsub.s32 %v754, %v756
      %v758 = vrot.slane %v750, %v757
      %760 = vset.pattern.permute.xlu0 0
      %761 = vperm.xlu0 %760, %v611
      %v762 = vpop.permute.xlu0 %761
      %v765 = vunpack.c.l.s4 839922192
      %v766 = vunpack.c.0.s8 %v765
      %v767 = vlaneseq
      %v768 = vshrl.u32 %v767, 7
      %v769 = vsub.s32 %v766, %v768
      %v770 = vrot.slane %v762, %v769
      %772 = vset.pattern.permute.xlu0 0
      %773 = vperm.xlu0 %772, %v612
      %v774 = vpop.permute.xlu0 %773
      %v777 = vunpack.c.l.s4 839922192
      %v778 = vunpack.c.0.s8 %v777
      %v779 = vlaneseq
      %v780 = vshrl.u32 %v779, 7
      %v781 = vsub.s32 %v778, %v780
      %v782 = vrot.slane %v774, %v781
      %784 = vset.pattern.permute.xlu0 0
      %785 = vperm.xlu0 %784, %v613
      %v786 = vpop.permute.xlu0 %785
      %v789 = vunpack.c.l.s4 839922192
      %v790 = vunpack.c.0.s8 %v789
      %v791 = vlaneseq
      %v792 = vshrl.u32 %v791, 7
      %v793 = vsub.s32 %v790, %v792
      %v794 = vrot.slane %v786, %v793
      %796 = vset.pattern.permute.xlu0 0
      %797 = vperm.xlu0 %796, %v614
      %v798 = vpop.permute.xlu0 %797
      %v801 = vunpack.c.l.s4 839922192
      %v802 = vunpack.c.0.s8 %v801
      %v803 = vlaneseq
      %v804 = vshrl.u32 %v803, 7
      %v805 = vsub.s32 %v802, %v804
      %v806 = vrot.slane %v798, %v805
      %v823 = vunpack.c.l.b16 %v626
      %v824 = vunpack.c.l.b16 %v638
      %v825 = vunpack.c.l.b16 %v650
      %v826 = vunpack.c.l.b16 %v662
      %v827 = vunpack.c.l.b16 %v674
      %v828 = vunpack.c.l.b16 %v686
      %v829 = vunpack.c.l.b16 %v698
      %v830 = vunpack.c.l.b16 %v710
      %v831 = vunpack.c.l.b16 %v722
      %v832 = vunpack.c.l.b16 %v734
      %v833 = vunpack.c.l.b16 %v746
      %v834 = vunpack.c.l.b16 %v758
      %v835 = vunpack.c.l.b16 %v770
      %v836 = vunpack.c.l.b16 %v782
      %v837 = vunpack.c.l.b16 %v794
      %v838 = vunpack.c.l.b16 %v806
      %v839 = vpack.c.b16 %v824, %v823
      %v840 = vpack.c.b16 %v826, %v825
      %v841 = vpack.c.b16 %v828, %v827
      %v842 = vpack.c.b16 %v830, %v829
      %v843 = vpack.c.b16 %v832, %v831
      %v844 = vpack.c.b16 %v834, %v833
      %v845 = vpack.c.b16 %v836, %v835
      %v846 = vpack.c.b16 %v838, %v837
      %v855 = vadd.bf16 %v591, %v839
      %v856 = vadd.bf16 %v592, %v840
      %v857 = vadd.bf16 %v593, %v841
      %v858 = vadd.bf16 %v594, %v842
      %v859 = vadd.bf16 %v595, %v843
      %v860 = vadd.bf16 %v596, %v844
      %v861 = vadd.bf16 %v597, %v845
      %v862 = vadd.bf16 %v598, %v846
      %v863 = vmul.bf16 %v855, 1045249613
      %v864 = vmul.bf16 %v856, 1045249613
      %v865 = vmul.bf16 %v857, 1045249613
      %v866 = vmul.bf16 %v858, 1045249613
      %v867 = vmul.bf16 %v859, 1045249613
      %v868 = vmul.bf16 %v860, 1045249613
      %v869 = vmul.bf16 %v861, 1045249613
      %v870 = vmul.bf16 %v862, 1045249613
      %v871 = vmax.bf16 %v855, %v863
      %v872 = vmax.bf16 %v856, %v864
      %v873 = vmax.bf16 %v857, %v865
      %v874 = vmax.bf16 %v858, %v866
      %v875 = vmax.bf16 %v859, %v867
      %v876 = vmax.bf16 %v860, %v868
      %v877 = vmax.bf16 %v861, %v869
      %v878 = vmax.bf16 %v862, %v870
      %v879 = vld [vmem:[%s4] sm:$0xf]
      %v880 = vld [vmem:[%s4 + $0x4] sm:$0xf]
      %v881 = vld [vmem:[%s4 + $0x8] sm:$0xf]
      %v882 = vld [vmem:[%s4 + $0xc] sm:$0xf]
      %v883 = vld [vmem:[%s4 + $0x10] sm:$0xf]
      %v884 = vld [vmem:[%s4 + $0x14] sm:$0xf]
      %v885 = vld [vmem:[%s4 + $0x18] sm:$0xf]
      %v886 = vld [vmem:[%s4 + $0x1c] sm:$0xf]
      %v887 = vld [vmem:[%s4 + $0x20] sm:$0xf]
      %v888 = vld [vmem:[%s4 + $0x24] sm:$0xf]
      %v889 = vld [vmem:[%s4 + $0x28] sm:$0xf]
      %v890 = vld [vmem:[%s4 + $0x2c] sm:$0xf]
      %v891 = vld [vmem:[%s4 + $0x30] sm:$0xf]
      %v892 = vld [vmem:[%s4 + $0x34] sm:$0xf]
      %v893 = vld [vmem:[%s4 + $0x38] sm:$0xf]
      %v894 = vld [vmem:[%s4 + $0x3c] sm:$0xf]
      %896 = vset.pattern.permute.xlu0 0
      %897 = vperm.xlu0 %896, %v879
      %v898 = vpop.permute.xlu0 %897
      %v901 = vunpack.c.l.s4 839922192
      %v902 = vunpack.c.0.s8 %v901
      %v903 = vlaneseq
      %v904 = vshrl.u32 %v903, 7
      %v905 = vsub.s32 %v902, %v904
      %v906 = vrot.slane %v898, %v905
      %908 = vset.pattern.permute.xlu0 0
      %909 = vperm.xlu0 %908, %v880
      %v910 = vpop.permute.xlu0 %909
      %v913 = vunpack.c.l.s4 839922192
      %v914 = vunpack.c.0.s8 %v913
      %v915 = vlaneseq
      %v916 = vshrl.u32 %v915, 7
      %v917 = vsub.s32 %v914, %v916
      %v918 = vrot.slane %v910, %v917
      %920 = vset.pattern.permute.xlu0 0
      %921 = vperm.xlu0 %920, %v881
      %v922 = vpop.permute.xlu0 %921
      %v925 = vunpack.c.l.s4 839922192
      %v926 = vunpack.c.0.s8 %v925
      %v927 = vlaneseq
      %v928 = vshrl.u32 %v927, 7
      %v929 = vsub.s32 %v926, %v928
      %v930 = vrot.slane %v922, %v929
      %932 = vset.pattern.permute.xlu0 0
      %933 = vperm.xlu0 %932, %v882
      %v934 = vpop.permute.xlu0 %933
      %v937 = vunpack.c.l.s4 839922192
      %v938 = vunpack.c.0.s8 %v937
      %v939 = vlaneseq
      %v940 = vshrl.u32 %v939, 7
      %v941 = vsub.s32 %v938, %v940
      %v942 = vrot.slane %v934, %v941
      %944 = vset.pattern.permute.xlu0 0
      %945 = vperm.xlu0 %944, %v883
      %v946 = vpop.permute.xlu0 %945
      %v949 = vunpack.c.l.s4 839922192
      %v950 = vunpack.c.0.s8 %v949
      %v951 = vlaneseq
      %v952 = vshrl.u32 %v951, 7
      %v953 = vsub.s32 %v950, %v952
      %v954 = vrot.slane %v946, %v953
      %956 = vset.pattern.permute.xlu0 0
      %957 = vperm.xlu0 %956, %v884
      %v958 = vpop.permute.xlu0 %957
      %v961 = vunpack.c.l.s4 839922192
      %v962 = vunpack.c.0.s8 %v961
      %v963 = vlaneseq
      %v964 = vshrl.u32 %v963, 7
      %v965 = vsub.s32 %v962, %v964
      %v966 = vrot.slane %v958, %v965
      %968 = vset.pattern.permute.xlu0 0
      %969 = vperm.xlu0 %968, %v885
      %v970 = vpop.permute.xlu0 %969
      %v973 = vunpack.c.l.s4 839922192
      %v974 = vunpack.c.0.s8 %v973
      %v975 = vlaneseq
      %v976 = vshrl.u32 %v975, 7
      %v977 = vsub.s32 %v974, %v976
      %v978 = vrot.slane %v970, %v977
      %980 = vset.pattern.permute.xlu0 0
      %981 = vperm.xlu0 %980, %v886
      %v982 = vpop.permute.xlu0 %981
      %v985 = vunpack.c.l.s4 839922192
      %v986 = vunpack.c.0.s8 %v985
      %v987 = vlaneseq
      %v988 = vshrl.u32 %v987, 7
      %v989 = vsub.s32 %v986, %v988
      %v990 = vrot.slane %v982, %v989
      %992 = vset.pattern.permute.xlu0 0
      %993 = vperm.xlu0 %992, %v887
      %v994 = vpop.permute.xlu0 %993
      %v997 = vunpack.c.l.s4 839922192
      %v998 = vunpack.c.0.s8 %v997
      %v999 = vlaneseq
      %v1000 = vshrl.u32 %v999, 7
      %v1001 = vsub.s32 %v998, %v1000
      %v1002 = vrot.slane %v994, %v1001
      %1004 = vset.pattern.permute.xlu0 0
      %1005 = vperm.xlu0 %1004, %v888
      %v1006 = vpop.permute.xlu0 %1005
      %v1009 = vunpack.c.l.s4 839922192
      %v1010 = vunpack.c.0.s8 %v1009
      %v1011 = vlaneseq
      %v1012 = vshrl.u32 %v1011, 7
      %v1013 = vsub.s32 %v1010, %v1012
      %v1014 = vrot.slane %v1006, %v1013
      %1016 = vset.pattern.permute.xlu0 0
      %1017 = vperm.xlu0 %1016, %v889
      %v1018 = vpop.permute.xlu0 %1017
      %v1021 = vunpack.c.l.s4 839922192
      %v1022 = vunpack.c.0.s8 %v1021
      %v1023 = vlaneseq
      %v1024 = vshrl.u32 %v1023, 7
      %v1025 = vsub.s32 %v1022, %v1024
      %v1026 = vrot.slane %v1018, %v1025
      %1028 = vset.pattern.permute.xlu0 0
      %1029 = vperm.xlu0 %1028, %v890
      %v1030 = vpop.permute.xlu0 %1029
      %v1033 = vunpack.c.l.s4 839922192
      %v1034 = vunpack.c.0.s8 %v1033
      %v1035 = vlaneseq
      %v1036 = vshrl.u32 %v1035, 7
      %v1037 = vsub.s32 %v1034, %v1036
      %v1038 = vrot.slane %v1030, %v1037
      %1040 = vset.pattern.permute.xlu0 0
      %1041 = vperm.xlu0 %1040, %v891
      %v1042 = vpop.permute.xlu0 %1041
      %v1045 = vunpack.c.l.s4 839922192
      %v1046 = vunpack.c.0.s8 %v1045
      %v1047 = vlaneseq
      %v1048 = vshrl.u32 %v1047, 7
      %v1049 = vsub.s32 %v1046, %v1048
      %v1050 = vrot.slane %v1042, %v1049
      %1052 = vset.pattern.permute.xlu0 0
      %1053 = vperm.xlu0 %1052, %v892
      %v1054 = vpop.permute.xlu0 %1053
      %v1057 = vunpack.c.l.s4 839922192
      %v1058 = vunpack.c.0.s8 %v1057
      %v1059 = vlaneseq
      %v1060 = vshrl.u32 %v1059, 7
      %v1061 = vsub.s32 %v1058, %v1060
      %v1062 = vrot.slane %v1054, %v1061
      %1064 = vset.pattern.permute.xlu0 0
      %1065 = vperm.xlu0 %1064, %v893
      %v1066 = vpop.permute.xlu0 %1065
      %v1069 = vunpack.c.l.s4 839922192
      %v1070 = vunpack.c.0.s8 %v1069
      %v1071 = vlaneseq
      %v1072 = vshrl.u32 %v1071, 7
      %v1073 = vsub.s32 %v1070, %v1072
      %v1074 = vrot.slane %v1066, %v1073
      %1076 = vset.pattern.permute.xlu0 0
      %1077 = vperm.xlu0 %1076, %v894
      %v1078 = vpop.permute.xlu0 %1077
      %v1081 = vunpack.c.l.s4 839922192
      %v1082 = vunpack.c.0.s8 %v1081
      %v1083 = vlaneseq
      %v1084 = vshrl.u32 %v1083, 7
      %v1085 = vsub.s32 %v1082, %v1084
      %v1086 = vrot.slane %v1078, %v1085
      %v1103 = vunpack.c.l.b16 %v906
      %v1104 = vunpack.c.l.b16 %v918
      %v1105 = vunpack.c.l.b16 %v930
      %v1106 = vunpack.c.l.b16 %v942
      %v1107 = vunpack.c.l.b16 %v954
      %v1108 = vunpack.c.l.b16 %v966
      %v1109 = vunpack.c.l.b16 %v978
      %v1110 = vunpack.c.l.b16 %v990
      %v1111 = vunpack.c.l.b16 %v1002
      %v1112 = vunpack.c.l.b16 %v1014
      %v1113 = vunpack.c.l.b16 %v1026
      %v1114 = vunpack.c.l.b16 %v1038
      %v1115 = vunpack.c.l.b16 %v1050
      %v1116 = vunpack.c.l.b16 %v1062
      %v1117 = vunpack.c.l.b16 %v1074
      %v1118 = vunpack.c.l.b16 %v1086
      %v1119 = vpack.c.b16 %v1104, %v1103
      %v1120 = vpack.c.b16 %v1106, %v1105
      %v1121 = vpack.c.b16 %v1108, %v1107
      %v1122 = vpack.c.b16 %v1110, %v1109
      %v1123 = vpack.c.b16 %v1112, %v1111
      %v1124 = vpack.c.b16 %v1114, %v1113
      %v1125 = vpack.c.b16 %v1116, %v1115
      %v1126 = vpack.c.b16 %v1118, %v1117
      %v1135 = vmul.bf16 %v871, %v1119
      %v1136 = vmul.bf16 %v872, %v1120
      %v1137 = vmul.bf16 %v873, %v1121
      %v1138 = vmul.bf16 %v874, %v1122
      %v1139 = vmul.bf16 %v875, %v1123
      %v1140 = vmul.bf16 %v876, %v1124
      %v1141 = vmul.bf16 %v877, %v1125
      %v1142 = vmul.bf16 %v878, %v1126
      %v1143 = vunpack.c.l.bf16 %v1135
      %v1144 = vunpack.c.h.bf16 %v1135
      %v1145 = vunpack.c.l.bf16 %v1136
      %v1146 = vunpack.c.h.bf16 %v1136
      %v1147 = vunpack.c.l.bf16 %v1137
      %v1148 = vunpack.c.h.bf16 %v1137
      %v1149 = vunpack.c.l.bf16 %v1138
      %v1150 = vunpack.c.h.bf16 %v1138
      %v1151 = vunpack.c.l.bf16 %v1139
      %v1152 = vunpack.c.h.bf16 %v1139
      %v1153 = vunpack.c.l.bf16 %v1140
      %v1154 = vunpack.c.h.bf16 %v1140
      %v1155 = vunpack.c.l.bf16 %v1141
      %v1156 = vunpack.c.h.bf16 %v1141
      %v1157 = vunpack.c.l.bf16 %v1142
      %v1158 = vunpack.c.h.bf16 %v1142
      %v1159 = vadd.f32 %v1143, %v1144
      %v1160 = vadd.f32 %v1159, %v1145
      %v1161 = vadd.f32 %v1160, %v1146
      %v1162 = vadd.f32 %v1161, %v1147
      %v1163 = vadd.f32 %v1162, %v1148
      %v1164 = vadd.f32 %v1163, %v1149
      %v1165 = vadd.f32 %v1164, %v1150
      %v1166 = vadd.f32 %v1165, %v1151
      %v1167 = vadd.f32 %v1166, %v1152
      %v1168 = vadd.f32 %v1167, %v1153
      %v1169 = vadd.f32 %v1168, %v1154
      %v1170 = vadd.f32 %v1169, %v1155
      %v1171 = vadd.f32 %v1170, %v1156
      %v1172 = vadd.f32 %v1171, %v1157
      %v1173 = vadd.f32 %v1172, %v1158
      %v1174 = vrot.slane %v1173, 4
      %v1175 = vadd.f32 %v1173, %v1174
      %v1176 = vrot.slane %v1175, 2
      %v1177 = vadd.f32 %v1175, %v1176
      %v1178 = vrot.slane %v1177, 1
      %v1179 = vadd.f32 %v1177, %v1178
      %1180 = vst [vmem:[%s217] sm:$0x1] %v1179
      %p1181 = scmp.lt.s32.totalorder %s16, 2
      %s1182 = scalar_select %p1181, %s16, 2
      %s1183 = scalar_lea.vmem %s5, %s1182
      // Predicated region
      $region41: #{discriminator_forward.1} parent=39 // pred_check
        %p1184 = pneg %p144
      $region42: #{discriminator_forward.1} parent=39 // pred_check_branch
        %1186 = sbr.rel (%p1184) target = $region44
      $region43: #{discriminator_forward.1} parent=39 // pred_region
        _
      $region44: #{discriminator_forward.1} parent=39 // pred_fallthru
        _
    $region40: #{discriminator_forward.1} parent=5 // pred_fallthru
      _
    %p1187 = scmp.le.s32.totalorder 2, %s11
    // Predicated region
    $region45: #{discriminator_forward.1} parent=5 // pred_check
      %p1188 = pneg %p1187
    $region46: #{discriminator_forward.1} parent=5 // pred_check_branch
      %1190 = sbr.rel (%p1188) target = $region48
    $region47: #{discriminator_forward.1} parent=5 // pred_region
      %s1191 = ssub.s32 %s11, 2
      // Predicated region
      $region49: #{discriminator_forward.1} parent=47 // pred_check
        %p1192 = pneg %p150
      $region50: #{discriminator_forward.1} parent=47 // pred_check_branch
        %1194 = sbr.rel (%p1192) target = $region52
      $region51: #{discriminator_forward.1} parent=47 // pred_region
        %p1195 = scmp.lt.s32.totalorder %s17, 2
        %s1196 = scalar_select %p1195, %s17, 2
        %s1197 = scalar_lea.vmem %s5, %s1196
      $region52: #{discriminator_forward.1} parent=47 // pred_fallthru
        _
    $region48: #{discriminator_forward.1} parent=5 // pred_fallthru
      _
  $region6: #{discriminator_forward.1} parent=0 // loop_footer
    %s15 = sadd.s32 1, %s11
  $region7: #{discriminator_forward.1} parent=0 // loop_footer_branch
    %10 = sbr.rel target = $region3
  $region8: #{discriminator_forward.1} parent=0 // loop_exit
    _

</llo_original>
